<compile_context>
chip_gen: v5e
topology: v5e:2x2
jax: 0.10.0
libtpu: 0.0.40
codegen_flags: <defaults>
</compile_context>

<pallas_src>
import functools

import jax
import jax.numpy as jnp
from jax.experimental import pallas as pl
from jax.experimental.pallas import tpu as pltpu


def _round_up(x, m):
    return (x + m - 1) // m * m


def _pad2(a, rows, cols):
    return jnp.pad(a, ((0, rows - a.shape[0]), (0, cols - a.shape[1])))


def _default_vmem_limit():
    cap = 64 * 1024 * 1024
    try:
        info = pltpu.get_tpu_info()
        cap = int(getattr(info, "vmem_capacity_bytes", cap))
    except Exception:
        pass
    # leave headroom; 96 MiB on v5e/v6e (128 MiB phys), 48 MiB on v7x (64 MiB phys)
    return int(max(32 * 1024 * 1024, min(cap * 3 // 4, 96 * 1024 * 1024)))


# ---------------------------------------------------------------------------
# Pass 1: L-invariant reductions (per 2-way split): ||q||^2, ||k||^2, K^T 1, K^T V
# ---------------------------------------------------------------------------
def _reduction_kernel(qin_ref, sin_ref, wq_ref, bq_ref, wkv_ref, bkv_ref,
                      kv_out, qsq_out, ksq_out, kssum_out,
                      kv_acc, qsq_acc, ksq_acc, kssum_acc,
                      *, n_valid, tile_n, hm_pad, tiles_per_split):
    s = pl.program_id(0)
    t = pl.program_id(1)

    @pl.when(t == 0)
    def _init():
        kv_acc[...] = jnp.zeros_like(kv_acc)
        qsq_acc[...] = jnp.zeros_like(qsq_acc)
        ksq_acc[...] = jnp.zeros_like(ksq_acc)
        kssum_acc[...] = jnp.zeros_like(kssum_acc)

    # Q and fused [K|V] projections (MXU, f32 accumulate).
    q = jnp.dot(qin_ref[...], wq_ref[...],
                preferred_element_type=jnp.float32) + bq_ref[...]
    kvp = jnp.dot(sin_ref[...], wkv_ref[...],
                  preferred_element_type=jnp.float32) + bkv_ref[...]
    k = kvp[:, :hm_pad]
    v = kvp[:, hm_pad:]

    # Mask padded rows of the N axis (they would otherwise carry the bias).
    row = ((s * tiles_per_split + t) * tile_n
           + jax.lax.broadcasted_iota(jnp.int32, (tile_n, 1), 0))
    valid = (row < n_valid).astype(jnp.float32)
    q = q * valid
    k = k * valid

    # Per-lane partial sums (VPU + sublane reduce); cross-lane reduce happens in XLA.
    qsq_acc[...] += jnp.sum(q * q, axis=0, keepdims=True)
    ksq_acc[...] += jnp.sum(k * k, axis=0, keepdims=True)
    kssum_acc[...] += jnp.sum(k, axis=0, keepdims=True)           # K^T 1 as a column sum

    # K^T V accumulation (packed H*M layout keeps this HMp x HMp small).
    mx_dt = qin_ref.dtype                                          # stream dtype (f32/bf16)
    dnums = (((0,), (0,)), ((), ()))
    kv_acc[...] += jax.lax.dot_general(k.astype(mx_dt), v.astype(mx_dt), dnums,
                                       preferred_element_type=jnp.float32)

    @pl.when(t == pl.num_programs(1) - 1)
    def _emit():
        kv_out[...] = kv_acc[...]
        qsq_out[...] = qsq_acc[...]
        ksq_out[...] = ksq_acc[...]
        kssum_out[...] = kssum_acc[...]


# ---------------------------------------------------------------------------
# Pass 2: out = [ (x@Wq_fused)_kv + (N/H) v ] / [ (x@Wq_fused)_den + N ] @ head_sum
# ---------------------------------------------------------------------------
def _apply_kernel(qin_ref, sin_ref, wqf_ref, bqf_ref, wv_ref, bv_ref, hsum_ref,
                  out_ref, *, n_valid, hm_pad, num_heads, approx_recip):
    t = jnp.dot(qin_ref[...], wqf_ref[...],
                preferred_element_type=jnp.float32) + bqf_ref[...]
    v = jnp.dot(sin_ref[...], wv_ref[...],
                preferred_element_type=jnp.float32) + bv_ref[...]

    num = t[:, :hm_pad] + (float(n_valid) / float(num_heads)) * v   # 1/H folded in
    den = t[:, hm_pad:] + float(n_valid)
    r = num * pl.reciprocal(den, approx=approx_recip)

    # Head mean via a tiny summing matmul (rides idle MXU); lane-dense store.
    out_ref[...] = jnp.dot(r, hsum_ref[...],
                           preferred_element_type=jnp.float32).astype(out_ref.dtype)


# ---------------------------------------------------------------------------
# Wrapper
# ---------------------------------------------------------------------------
def transconv_forward(query_input, source_input, params, *, num_heads,
                      out_channels, max_tile_n=1024,
                      stream_dtype=jnp.bfloat16, approx_recip=True):
    wq, bq, wk, bk, wv, bv = params
    n, c = query_input.shape
    l = source_input.shape[0]
    # Reference semantics (`attention_num += N * vs`) require N == L.
    assert n == l, "TransConvLayer kernel requires matching query/source row counts"
    h, m = num_heads, out_channels

    hm = h * m
    hm_pad = _round_up(hm, 128)          # packed H*M layout, padded once to 128 lanes
    m_out_pad = _round_up(m, 128)        # lane-dense output store
    c_pad = _round_up(c, 8)

    vmem_limit = _default_vmem_limit()

    # Padded f32 weights / biases (packed layout, zero-padded rows/cols).
    wq_p = _pad2(wq, c_pad, hm_pad)
    bq_p = _pad2(bq, 1, hm_pad)
    wk_p = _pad2(wk, c_pad, hm_pad)
    bk_p = _pad2(bk, 1, hm_pad)
    wv_p = _pad2(wv, c_pad, hm_pad)
    bv_p = _pad2(bv, 1, hm_pad)
    wkv_p = jnp.concatenate([wk_p, wv_p], axis=1)        # fused [K|V] projection
    bkv_p = jnp.concatenate([bk_p, bv_p], axis=1)

    # Row-tile size: as big as the VMEM budget allows (amortizes grid-step overhead).
    stream_bytes = jnp.dtype(stream_dtype).itemsize
    per_row_bytes = 2 * c_pad * stream_bytes + m_out_pad * 4
    budget = max(vmem_limit // 3, 1 << 20)
    tile_cap = max(8, (budget // (2 * per_row_bytes)) // 8 * 8)
    tile_n = int(min(_round_up(min(max_tile_n, n), 8), tile_cap))

    n_tiles = (n + tile_n - 1) // tile_n
    num_splits = 2 if n_tiles >= 2 else 1                # 2-TC split for pass 1 (v7x)
    tiles_per_split = (n_tiles + num_splits - 1) // num_splits
    total_tiles = tiles_per_split * num_splits
    n_pad = total_tiles * tile_n

    qin = _pad2(query_input, n_pad, c_pad).astype(stream_dtype)
    sin = _pad2(source_input, n_pad, c_pad).astype(stream_dtype)
    wq_s = wq_p.astype(stream_dtype)
    wkv_s = wkv_p.astype(stream_dtype)
    wv_s = wv_p.astype(stream_dtype)

    rows1 = pl.BlockSpec((tile_n, c_pad), lambda s, t: (s * tiles_per_split + t, 0))
    res1 = lambda s, t: (0, 0)
    cparams = lambda sem: pltpu.CompilerParams(
        dimension_semantics=sem, vmem_limit_bytes=vmem_limit)

    # ---- pass 1: split-parallel global reductions ---------------------------
    kv_part, qsq_part, ksq_part, kssum_part = pl.pallas_call(
        functools.partial(_reduction_kernel, n_valid=n, tile_n=tile_n,
                          hm_pad=hm_pad, tiles_per_split=tiles_per_split),
        out_shape=(jax.ShapeDtypeStruct((num_splits, hm_pad, hm_pad), jnp.float32),
                   jax.ShapeDtypeStruct((num_splits, 1, hm_pad), jnp.float32),
                   jax.ShapeDtypeStruct((num_splits, 1, hm_pad), jnp.float32),
                   jax.ShapeDtypeStruct((num_splits, 1, hm_pad), jnp.float32)),
        grid=(num_splits, tiles_per_split),
        in_specs=[rows1, rows1,
                  pl.BlockSpec((c_pad, hm_pad), res1),
                  pl.BlockSpec((1, hm_pad), res1),
                  pl.BlockSpec((c_pad, 2 * hm_pad), res1),
                  pl.BlockSpec((1, 2 * hm_pad), res1)],
        out_specs=(pl.BlockSpec((None, hm_pad, hm_pad), lambda s, t: (s, 0, 0)),
                   pl.BlockSpec((None, 1, hm_pad), lambda s, t: (s, 0, 0)),
                   pl.BlockSpec((None, 1, hm_pad), lambda s, t: (s, 0, 0)),
                   pl.BlockSpec((None, 1, hm_pad), lambda s, t: (s, 0, 0))),
        scratch_shapes=[pltpu.VMEM((hm_pad, hm_pad), jnp.float32),
                        pltpu.VMEM((1, hm_pad), jnp.float32),
                        pltpu.VMEM((1, hm_pad), jnp.float32),
                        pltpu.VMEM((1, hm_pad), jnp.float32)],
        compiler_params=cparams(("parallel", "arbitrary")),
    )(qin, sin, wq_s, bq_p, wkv_s, bkv_p)

    # ---- tiny XLA glue: combine splits, build block-diag AB, fold into Wq ---
    kv = jnp.sum(kv_part, axis=0)                         # [HMp, HMp]
    qsq = jnp.sum(qsq_part)
    ksq = jnp.sum(ksq_part)
    ks_sum = jnp.sum(kssum_part, axis=(0, 1))             # [HMp]

    s_scale = jax.lax.rsqrt(qsq) * jax.lax.rsqrt(ksq)     # 1/(||q||*||k||), overflow-safe
    idx = jnp.arange(hm_pad)
    head = idx // m
    valid_col = idx < hm
    mask = ((head[:, None] == head[None, :])
            & valid_col[:, None] & valid_col[None, :]).astype(jnp.float32)
    ab_kv = kv * mask * (s_scale / h)                     # 1/H head-mean folded in
    ab_den = mask * ks_sum[:, None] * s_scale
    ab = jnp.concatenate([ab_kv, ab_den], axis=1)         # [HMp, 2*HMp]

    hp = jax.lax.Precision.HIGHEST
    wq_fused = jnp.dot(wq_p, ab, precision=hp)            # [C_pad, 2*HMp]
    bq_fused = jnp.dot(bq_p, ab, precision=hp)            # [1, 2*HMp], stays f32
    wqf_s = wq_fused.astype(stream_dtype)

    # Head-sum matrix: out[:, m'] = sum_h r[:, h*M + m'].
    hsum = (((idx[:, None] % m) == jnp.arange(m_out_pad)[None, :])
            & valid_col[:, None]).astype(jnp.float32)     # [HMp, M_out_pad]

    # ---- pass 2: row-tiled application ("parallel" -> both TCs) -------------
    rows2 = pl.BlockSpec((tile_n, c_pad), lambda i: (i, 0))
    res2 = lambda i: (0, 0)
    out_padded = pl.pallas_call(
        functools.partial(_apply_kernel, n_valid=n, hm_pad=hm_pad, num_heads=h,
                          approx_recip=approx_recip),
        out_shape=jax.ShapeDtypeStruct((n_pad, m_out_pad), jnp.float32),
        grid=(total_tiles,),
        in_specs=[rows2, rows2,
                  pl.BlockSpec((c_pad, 2 * hm_pad), res2),
                  pl.BlockSpec((1, 2 * hm_pad), res2),
                  pl.BlockSpec((c_pad, hm_pad), res2),
                  pl.BlockSpec((1, hm_pad), res2),
                  pl.BlockSpec((hm_pad, m_out_pad), res2)],
        out_specs=pl.BlockSpec((tile_n, m_out_pad), lambda i: (i, 0)),
        compiler_params=cparams(("parallel",)),
    )(qin, sin, wqf_s, bq_fused, wv_s, bv_p, hsum)

    return out_padded[:n, :m]


# ---------------------------------------------------------------------------
# Pure-JAX reference (mirrors the PyTorch module) and demo
# ---------------------------------------------------------------------------
def reference_forward(query_input, source_input, params, *, num_heads, out_channels):
    wq, bq, wk, bk, wv, bv = params
    h, m = num_heads, out_channels
    n = query_input.shape[0]
    hp = jax.lax.Precision.HIGHEST
    q = jnp.dot(query_input, wq, precision=hp) + bq
    k = jnp.dot(source_input, wk, precision=hp) + bk
    v = jnp.dot(source_input, wv, precision=hp) + bv
    qs = (q / jnp.linalg.norm(q)).reshape(-1, h, m)
    ks = (k / jnp.linalg.norm(k)).reshape(-1, h, m)
    vs = v.reshape(-1, h, m)
    kvs = jnp.einsum('lhm,lhd->hmd', ks, vs, precision=hp)
    num = jnp.einsum('nhm,hmd->nhd', qs, kvs, precision=hp) + n * vs
    ks_sum = jnp.einsum('lhm->hm', ks)
    denom = jnp.einsum('nhm,hm->nh', qs, ks_sum, precision=hp)[..., None] + n
    return (num / denom).mean(axis=1)


def init_linear(key, in_features, out_features):
    """Deterministic nn.Linear-style init: U(-1/sqrt(fan_in), 1/sqrt(fan_in))."""
    kw, kb = jax.random.split(key)
    bound = 1.0 / jnp.sqrt(jnp.float32(in_features))
    w = jax.random.uniform(kw, (in_features, out_features), jnp.float32, -bound, bound)
    b = jax.random.uniform(kb, (1, out_features), jnp.float32, -bound, bound)
    return w, b


if __name__ == "__main__":
    # Small shapes consistent with the module: N=L nodes, C_in features, H heads.
    n_nodes = 20          # not a multiple of the row tile -> exercises masking
    in_channels = 12      # not a multiple of 8 -> exercises channel padding
    out_channels = 8
    num_heads = 2
    hm = num_heads * out_channels

    key = jax.random.PRNGKey(0)
    kq, kk, kv_, kx, ksrc = jax.random.split(key, 5)
    wq, bq = init_linear(kq, in_channels, hm)
    wk, bk = init_linear(kk, in_channels, hm)
    wv, bv = init_linear(kv_, in_channels, hm)
    params = (wq, bq, wk, bk, wv, bv)

    query_input = jax.random.normal(kx, (n_nodes, in_channels), jnp.float32)
    source_input = jax.random.normal(ksrc, (n_nodes, in_channels), jnp.float32)

    ref = reference_forward(query_input, source_input, params,
                            num_heads=num_heads, out_channels=out_channels)

    # Exact-math path (f32 streaming, exact reciprocal): tight numerical check.
    # max_tile_n=8 forces a multi-tile grid + 2-way pass-1 split + row masking.
    out32 = transconv_forward(query_input, source_input, params,
                              num_heads=num_heads, out_channels=out_channels,
                              max_tile_n=8, stream_dtype=jnp.float32,
                              approx_recip=False)
    out32 = jax.block_until_ready(out32)
    assert out32.shape == (n_nodes, out_channels)
    assert jnp.allclose(out32, ref, rtol=1e-3, atol=1e-4), "f32 path mismatch vs reference"

    # Fast path (bf16 streamed operands + EUP approx reciprocal): loose check.
    out16 = transconv_forward(query_input, source_input, params,
                              num_heads=num_heads, out_channels=out_channels,
                              max_tile_n=8, stream_dtype=jnp.bfloat16,
                              approx_recip=True)
    out16 = jax.block_until_ready(out16)
    assert out16.shape == (n_nodes, out_channels)
    assert jnp.allclose(out16, ref, rtol=8e-2, atol=8e-3), "bf16 path mismatch vs reference"

    print("KERNEL_OK")
</pallas_src>

<mosaic_0001>
module attributes {stable_mosaic.version = 11 : i64} {
  func.func @_reduction_kernel(%arg0: i32, %arg1: i32, %arg2: memref<8x16xf32, #tpu.memory_space<vmem>>, %arg3: memref<8x16xf32, #tpu.memory_space<vmem>>, %arg4: memref<16x128xf32, #tpu.memory_space<vmem>>, %arg5: memref<1x128xf32, #tpu.memory_space<vmem>>, %arg6: memref<16x256xf32, #tpu.memory_space<vmem>>, %arg7: memref<1x256xf32, #tpu.memory_space<vmem>>, %arg8: memref<1x128x128xf32, #tpu.memory_space<vmem>>, %arg9: memref<1x1x128xf32, #tpu.memory_space<vmem>>, %arg10: memref<1x1x128xf32, #tpu.memory_space<vmem>>, %arg11: memref<1x1x128xf32, #tpu.memory_space<vmem>>, %arg12: memref<128x128xf32, #tpu.memory_space<vmem>>, %arg13: memref<1x128xf32, #tpu.memory_space<vmem>>, %arg14: memref<1x128xf32, #tpu.memory_space<vmem>>, %arg15: memref<1x128xf32, #tpu.memory_space<vmem>>) attributes {dimension_semantics = [#tpu.dimension_semantics<parallel>, #tpu.dimension_semantics<arbitrary>], iteration_bounds = array<i64: 2, 2>, scalar_prefetch = 0 : i64, scratch_operands = 4 : i64, tpu.core_type = #tpu.core_type<tc>, window_params = [{transform_indices = @transform_0, window_bounds = array<i64: 8, 16>}, {transform_indices = @transform_1, window_bounds = array<i64: 8, 16>}, {pipeline_mode = #tpu.pipeline_mode<synchronous>, transform_indices = @transform_2, window_bounds = array<i64: 16, 128>}, {pipeline_mode = #tpu.pipeline_mode<synchronous>, transform_indices = @transform_3, window_bounds = array<i64: 1, 128>}, {pipeline_mode = #tpu.pipeline_mode<synchronous>, transform_indices = @transform_4, window_bounds = array<i64: 16, 256>}, {pipeline_mode = #tpu.pipeline_mode<synchronous>, transform_indices = @transform_5, window_bounds = array<i64: 1, 256>}, {transform_indices = @transform_6, window_bounds = array<i64: 1, 128, 128>}, {transform_indices = @transform_7, window_bounds = array<i64: 1, 1, 128>}, {transform_indices = @transform_8, window_bounds = array<i64: 1, 1, 128>}, {transform_indices = @transform_9, window_bounds = array<i64: 1, 1, 128>}]} {
    %c0_i32 = arith.constant 0 : i32
    %0 = arith.cmpi eq, %arg1, %c0_i32 : i32
    %1 = arith.extui %0 : i1 to i32
    %c0_i32_0 = arith.constant 0 : i32
    %2 = arith.cmpi ne, %1, %c0_i32_0 : i32
    scf.if %2 {
      %cst_34 = arith.constant 0.000000e+00 : f32
      %55 = vector.broadcast %cst_34 : f32 to vector<128x128xf32>
      %c0_35 = arith.constant 0 : index
      %c0_36 = arith.constant 0 : index
      %56 = vector.load %arg12[%c0_35, %c0_36] : memref<128x128xf32, #tpu.memory_space<vmem>>, vector<128x128xf32>
      tpu.vector_store %arg12[%c0_35, %c0_36], %55 {strides = array<i32>} : memref<128x128xf32, #tpu.memory_space<vmem>>, vector<128x128xf32>,
      %cst_37 = arith.constant 0.000000e+00 : f32
      %57 = vector.broadcast %cst_37 : f32 to vector<1x128xf32>
      %c0_38 = arith.constant 0 : index
      %c0_39 = arith.constant 0 : index
      %58 = vector.load %arg13[%c0_38, %c0_39] : memref<1x128xf32, #tpu.memory_space<vmem>>, vector<1x128xf32>
      tpu.vector_store %arg13[%c0_38, %c0_39], %57 {strides = array<i32>} : memref<1x128xf32, #tpu.memory_space<vmem>>, vector<1x128xf32>,
      %cst_40 = arith.constant 0.000000e+00 : f32
      %59 = vector.broadcast %cst_40 : f32 to vector<1x128xf32>
      %c0_41 = arith.constant 0 : index
      %c0_42 = arith.constant 0 : index
      %60 = vector.load %arg14[%c0_41, %c0_42] : memref<1x128xf32, #tpu.memory_space<vmem>>, vector<1x128xf32>
      tpu.vector_store %arg14[%c0_41, %c0_42], %59 {strides = array<i32>} : memref<1x128xf32, #tpu.memory_space<vmem>>, vector<1x128xf32>,
      %cst_43 = arith.constant 0.000000e+00 : f32
      %61 = vector.broadcast %cst_43 : f32 to vector<1x128xf32>
      %c0_44 = arith.constant 0 : index
      %c0_45 = arith.constant 0 : index
      %62 = vector.load %arg15[%c0_44, %c0_45] : memref<1x128xf32, #tpu.memory_space<vmem>>, vector<1x128xf32>
      tpu.vector_store %arg15[%c0_44, %c0_45], %61 {strides = array<i32>} : memref<1x128xf32, #tpu.memory_space<vmem>>, vector<1x128xf32>,
    } else {
    }
    %c0 = arith.constant 0 : index
    %c0_1 = arith.constant 0 : index
    %3 = vector.load %arg2[%c0, %c0_1] : memref<8x16xf32, #tpu.memory_space<vmem>>, vector<8x16xf32>
    %c0_2 = arith.constant 0 : index
    %c0_3 = arith.constant 0 : index
    %4 = vector.load %arg4[%c0_2, %c0_3] : memref<16x128xf32, #tpu.memory_space<vmem>>, vector<16x128xf32>
    %cst = arith.constant dense<0.000000e+00> : vector<8x128xf32>
    %5 = tpu.matmul %3, %4, %cst {dimension_numbers = #tpu.dot_dimension_numbers<[1], [0], [0], [1], [0, 0, 1, 1], [], []>} : vector<8x16xf32>, vector<16x128xf32>, vector<8x128xf32> -> vector<8x128xf32>
    %c0_4 = arith.constant 0 : index
    %c0_5 = arith.constant 0 : index
    %6 = vector.load %arg5[%c0_4, %c0_5] : memref<1x128xf32, #tpu.memory_space<vmem>>, vector<1x128xf32>
    %7 = vector.broadcast %6 : vector<1x128xf32> to vector<8x128xf32>
    %8 = arith.addf %5, %7 : vector<8x128xf32>
    %c0_6 = arith.constant 0 : index
    %c0_7 = arith.constant 0 : index
    %9 = vector.load %arg3[%c0_6, %c0_7] : memref<8x16xf32, #tpu.memory_space<vmem>>, vector<8x16xf32>
    %c0_8 = arith.constant 0 : index
    %c0_9 = arith.constant 0 : index
    %10 = vector.load %arg6[%c0_8, %c0_9] : memref<16x256xf32, #tpu.memory_space<vmem>>, vector<16x256xf32>
    %cst_10 = arith.constant dense<0.000000e+00> : vector<8x256xf32>
    %11 = tpu.matmul %9, %10, %cst_10 {dimension_numbers = #tpu.dot_dimension_numbers<[1], [0], [0], [1], [0, 0, 1, 1], [], []>} : vector<8x16xf32>, vector<16x256xf32>, vector<8x256xf32> -> vector<8x256xf32>
    %c0_11 = arith.constant 0 : index
    %c0_12 = arith.constant 0 : index
    %12 = vector.load %arg7[%c0_11, %c0_12] : memref<1x256xf32, #tpu.memory_space<vmem>>, vector<1x256xf32>
    %13 = vector.broadcast %12 : vector<1x256xf32> to vector<8x256xf32>
    %14 = arith.addf %11, %13 : vector<8x256xf32>
    %15 = vector.extract_strided_slice %14 {offsets = [0, 0], sizes = [8, 128], strides = [1, 1]} : vector<8x256xf32> to vector<8x128xf32>
    %16 = vector.extract_strided_slice %14 {offsets = [0, 128], sizes = [8, 128], strides = [1, 1]} : vector<8x256xf32> to vector<8x128xf32>
    %c2_i32 = arith.constant 2 : i32
    %17 = arith.muli %arg0, %c2_i32 : i32
    %18 = arith.addi %17, %arg1 : i32
    %c8_i32 = arith.constant 8 : i32
    %19 = arith.muli %18, %c8_i32 : i32
    %20 = tpu.iota {dimensions = array<i32: 0>} : vector<8x1xi32>
    %21 = vector.broadcast %19 : i32 to vector<8x1xi32>
    %22 = arith.addi %21, %20 : vector<8x1xi32>
    %c20_i32 = arith.constant 20 : i32
    %23 = vector.broadcast %c20_i32 : i32 to vector<8x1xi32>
    %24 = arith.cmpi slt, %22, %23 : vector<8x1xi32>
    %25 = arith.extui %24 : vector<8x1xi1> to vector<8x1xi32>
    %26 = arith.sitofp %25 : vector<8x1xi32> to vector<8x1xf32>
    %27 = vector.broadcast %26 : vector<8x1xf32> to vector<8x128xf32>
    %28 = arith.mulf %8, %27 : vector<8x128xf32>
    %29 = vector.broadcast %26 : vector<8x1xf32> to vector<8x128xf32>
    %30 = arith.mulf %15, %29 : vector<8x128xf32>
    %c0_13 = arith.constant 0 : index
    %c0_14 = arith.constant 0 : index
    %31 = vector.load %arg13[%c0_13, %c0_14] : memref<1x128xf32, #tpu.memory_space<vmem>>, vector<1x128xf32>
    %32 = arith.mulf %28, %28 : vector<8x128xf32>
    %cst_15 = arith.constant dense<0.000000e+00> : vector<128xf32>
    %33 = vector.multi_reduction <add>, %32, %cst_15 [0] : vector<8x128xf32> to vector<128xf32>
    %34 = vector.shape_cast %33 : vector<128xf32> to vector<1x128xf32>
    %35 = arith.addf %31, %34 : vector<1x128xf32>
    %c0_16 = arith.constant 0 : index
    %c0_17 = arith.constant 0 : index
    %36 = vector.load %arg13[%c0_16, %c0_17] : memref<1x128xf32, #tpu.memory_space<vmem>>, vector<1x128xf32>
    tpu.vector_store %arg13[%c0_16, %c0_17], %35 {strides = array<i32>} : memref<1x128xf32, #tpu.memory_space<vmem>>, vector<1x128xf32>,
    %c0_18 = arith.constant 0 : index
    %c0_19 = arith.constant 0 : index
    %37 = vector.load %arg14[%c0_18, %c0_19] : memref<1x128xf32, #tpu.memory_space<vmem>>, vector<1x128xf32>
    %38 = arith.mulf %30, %30 : vector<8x128xf32>
    %cst_20 = arith.constant dense<0.000000e+00> : vector<128xf32>
    %39 = vector.multi_reduction <add>, %38, %cst_20 [0] : vector<8x128xf32> to vector<128xf32>
    %40 = vector.shape_cast %39 : vector<128xf32> to vector<1x128xf32>
    %41 = arith.addf %37, %40 : vector<1x128xf32>
    %c0_21 = arith.constant 0 : index
    %c0_22 = arith.constant 0 : index
    %42 = vector.load %arg14[%c0_21, %c0_22] : memref<1x128xf32, #tpu.memory_space<vmem>>, vector<1x128xf32>
    tpu.vector_store %arg14[%c0_21, %c0_22], %41 {strides = array<i32>} : memref<1x128xf32, #tpu.memory_space<vmem>>, vector<1x128xf32>,
    %c0_23 = arith.constant 0 : index
    %c0_24 = arith.constant 0 : index
    %43 = vector.load %arg15[%c0_23, %c0_24] : memref<1x128xf32, #tpu.memory_space<vmem>>, vector<1x128xf32>
    %cst_25 = arith.constant dense<0.000000e+00> : vector<128xf32>
    %44 = vector.multi_reduction <add>, %30, %cst_25 [0] : vector<8x128xf32> to vector<128xf32>
    %45 = vector.shape_cast %44 : vector<128xf32> to vector<1x128xf32>
    %46 = arith.addf %43, %45 : vector<1x128xf32>
    %c0_26 = arith.constant 0 : index
    %c0_27 = arith.constant 0 : index
    %47 = vector.load %arg15[%c0_26, %c0_27] : memref<1x128xf32, #tpu.memory_space<vmem>>, vector<1x128xf32>
    tpu.vector_store %arg15[%c0_26, %c0_27], %46 {strides = array<i32>} : memref<1x128xf32, #tpu.memory_space<vmem>>, vector<1x128xf32>,
    %c0_28 = arith.constant 0 : index
    %c0_29 = arith.constant 0 : index
    %48 = vector.load %arg12[%c0_28, %c0_29] : memref<128x128xf32, #tpu.memory_space<vmem>>, vector<128x128xf32>
    %cst_30 = arith.constant dense<0.000000e+00> : vector<128x128xf32>
    %49 = tpu.matmul %30, %16, %cst_30 {dimension_numbers = #tpu.dot_dimension_numbers<[0], [0], [1], [1], [0, 1, 1, 1], [], []>} : vector<8x128xf32>, vector<8x128xf32>, vector<128x128xf32> -> vector<128x128xf32>
    %50 = arith.addf %48, %49 : vector<128x128xf32>
    %c0_31 = arith.constant 0 : index
    %c0_32 = arith.constant 0 : index
    %51 = vector.load %arg12[%c0_31, %c0_32] : memref<128x128xf32, #tpu.memory_space<vmem>>, vector<128x128xf32>
    tpu.vector_store %arg12[%c0_31, %c0_32], %50 {strides = array<i32>} : memref<128x128xf32, #tpu.memory_space<vmem>>, vector<128x128xf32>,
    %c1_i32 = arith.constant 1 : i32
    %52 = arith.cmpi eq, %arg1, %c1_i32 : i32
    %53 = arith.extui %52 : i1 to i32
    %c0_i32_33 = arith.constant 0 : i32
    %54 = arith.cmpi ne, %53, %c0_i32_33 : i32
    scf.if %54 {
      %c0_34 = arith.constant 0 : index
      %c0_35 = arith.constant 0 : index
      %55 = vector.load %arg12[%c0_34, %c0_35] : memref<128x128xf32, #tpu.memory_space<vmem>>, vector<128x128xf32>
      %c0_36 = arith.constant 0 : index
      %c0_37 = arith.constant 0 : index
      %c0_38 = arith.constant 0 : index
      %56 = vector.load %arg8[%c0_36, %c0_37, %c0_38] : memref<1x128x128xf32, #tpu.memory_space<vmem>>, vector<1x128x128xf32>
      %57 = vector.shape_cast %56 : vector<1x128x128xf32> to vector<128x128xf32>
      %58 = vector.shape_cast %55 : vector<128x128xf32> to vector<1x128x128xf32>
      tpu.vector_store %arg8[%c0_36, %c0_37, %c0_38], %58 {strides = array<i32>} : memref<1x128x128xf32, #tpu.memory_space<vmem>>, vector<1x128x128xf32>,
      %c0_39 = arith.constant 0 : index
      %c0_40 = arith.constant 0 : index
      %59 = vector.load %arg13[%c0_39, %c0_40] : memref<1x128xf32, #tpu.memory_space<vmem>>, vector<1x128xf32>
      %c0_41 = arith.constant 0 : index
      %c0_42 = arith.constant 0 : index
      %c0_43 = arith.constant 0 : index
      %60 = vector.load %arg9[%c0_41, %c0_42, %c0_43] : memref<1x1x128xf32, #tpu.memory_space<vmem>>, vector<1x1x128xf32>
      %61 = vector.shape_cast %60 : vector<1x1x128xf32> to vector<1x128xf32>
      %62 = vector.shape_cast %59 : vector<1x128xf32> to vector<1x1x128xf32>
      tpu.vector_store %arg9[%c0_41, %c0_42, %c0_43], %62 {strides = array<i32>} : memref<1x1x128xf32, #tpu.memory_space<vmem>>, vector<1x1x128xf32>,
      %c0_44 = arith.constant 0 : index
      %c0_45 = arith.constant 0 : index
      %63 = vector.load %arg14[%c0_44, %c0_45] : memref<1x128xf32, #tpu.memory_space<vmem>>, vector<1x128xf32>
      %c0_46 = arith.constant 0 : index
      %c0_47 = arith.constant 0 : index
      %c0_48 = arith.constant 0 : index
      %64 = vector.load %arg10[%c0_46, %c0_47, %c0_48] : memref<1x1x128xf32, #tpu.memory_space<vmem>>, vector<1x1x128xf32>
      %65 = vector.shape_cast %64 : vector<1x1x128xf32> to vector<1x128xf32>
      %66 = vector.shape_cast %63 : vector<1x128xf32> to vector<1x1x128xf32>
      tpu.vector_store %arg10[%c0_46, %c0_47, %c0_48], %66 {strides = array<i32>} : memref<1x1x128xf32, #tpu.memory_space<vmem>>, vector<1x1x128xf32>,
      %c0_49 = arith.constant 0 : index
      %c0_50 = arith.constant 0 : index
      %67 = vector.load %arg15[%c0_49, %c0_50] : memref<1x128xf32, #tpu.memory_space<vmem>>, vector<1x128xf32>
      %c0_51 = arith.constant 0 : index
      %c0_52 = arith.constant 0 : index
      %c0_53 = arith.constant 0 : index
      %68 = vector.load %arg11[%c0_51, %c0_52, %c0_53] : memref<1x1x128xf32, #tpu.memory_space<vmem>>, vector<1x1x128xf32>
      %69 = vector.shape_cast %68 : vector<1x1x128xf32> to vector<1x128xf32>
      %70 = vector.shape_cast %67 : vector<1x128xf32> to vector<1x1x128xf32>
      tpu.vector_store %arg11[%c0_51, %c0_52, %c0_53], %70 {strides = array<i32>} : memref<1x1x128xf32, #tpu.memory_space<vmem>>, vector<1x1x128xf32>,
    } else {
    }
    return
  }
  func.func @transform_0(%arg0: i32, %arg1: i32) -> (i32, i32) {
    %c2_i32 = arith.constant 2 : i32
    %0 = arith.muli %arg0, %c2_i32 : i32
    %1 = arith.addi %0, %arg1 : i32
    %c0_i32 = arith.constant 0 : i32
    %c0_i32_0 = arith.constant 0 : i32
    return %1, %c0_i32 : i32, i32
  }
  func.func @transform_1(%arg0: i32, %arg1: i32) -> (i32, i32) {
    %c2_i32 = arith.constant 2 : i32
    %0 = arith.muli %arg0, %c2_i32 : i32
    %1 = arith.addi %0, %arg1 : i32
    %c0_i32 = arith.constant 0 : i32
    %c0_i32_0 = arith.constant 0 : i32
    return %1, %c0_i32 : i32, i32
  }
  func.func @transform_2(%arg0: i32, %arg1: i32) -> (i32, i32) {
    %c0_i32 = arith.constant 0 : i32
    %c0_i32_0 = arith.constant 0 : i32
    %c0_i32_1 = arith.constant 0 : i32
    return %c0_i32, %c0_i32_0 : i32, i32
  }
  func.func @transform_3(%arg0: i32, %arg1: i32) -> (i32, i32) {
    %c0_i32 = arith.constant 0 : i32
    %c0_i32_0 = arith.constant 0 : i32
    %c0_i32_1 = arith.constant 0 : i32
    return %c0_i32, %c0_i32_0 : i32, i32
  }
  func.func @transform_4(%arg0: i32, %arg1: i32) -> (i32, i32) {
    %c0_i32 = arith.constant 0 : i32
    %c0_i32_0 = arith.constant 0 : i32
    %c0_i32_1 = arith.constant 0 : i32
    return %c0_i32, %c0_i32_0 : i32, i32
  }
  func.func @transform_5(%arg0: i32, %arg1: i32) -> (i32, i32) {
    %c0_i32 = arith.constant 0 : i32
    %c0_i32_0 = arith.constant 0 : i32
    %c0_i32_1 = arith.constant 0 : i32
    return %c0_i32, %c0_i32_0 : i32, i32
  }
  func.func @transform_6(%arg0: i32, %arg1: i32) -> (i32, i32, i32) {
    %c0_i32 = arith.constant 0 : i32
    %c0_i32_0 = arith.constant 0 : i32
    %c0_i32_1 = arith.constant 0 : i32
    return %arg0, %c0_i32, %c0_i32_0 : i32, i32, i32
  }
  func.func @transform_7(%arg0: i32, %arg1: i32) -> (i32, i32, i32) {
    %c0_i32 = arith.constant 0 : i32
    %c0_i32_0 = arith.constant 0 : i32
    %c0_i32_1 = arith.constant 0 : i32
    return %arg0, %c0_i32, %c0_i32_0 : i32, i32, i32
  }
  func.func @transform_8(%arg0: i32, %arg1: i32) -> (i32, i32, i32) {
    %c0_i32 = arith.constant 0 : i32
    %c0_i32_0 = arith.constant 0 : i32
    %c0_i32_1 = arith.constant 0 : i32
    return %arg0, %c0_i32, %c0_i32_0 : i32, i32, i32
  }
  func.func @transform_9(%arg0: i32, %arg1: i32) -> (i32, i32, i32) {
    %c0_i32 = arith.constant 0 : i32
    %c0_i32_0 = arith.constant 0 : i32
    %c0_i32_1 = arith.constant 0 : i32
    return %arg0, %c0_i32, %c0_i32_0 : i32, i32, i32
  }
}

</mosaic_0001>

<llo_original>
// kernel: tpu_custom_call.1
$region0: #{tpu_custom_call.1}
  #allocation0 [shape = 'u32[]', space=smem, size = 0x4, offset = 0x4, fixed_abs, tag = 'smem constant byte address 0x4 - core index']
  #allocation1 [shape = 'u32[72,128]{1,0:T(1,128)}', space=vmem, size = 0x9000, scoped, tag = 'internal scratch']
  #allocation2 [shape = 'f32[128,128]{1,0:T(8,128)}', space=vmem, size = 0x10000, scoped, tag = 'scratch operand']
  #allocation3 [shape = 'f32[1,128]{1,0:T(1,128)}', space=vmem, size = 0x200, scoped, tag = 'scratch operand']
  #allocation4 [shape = 'f32[1,128]{1,0:T(1,128)}', space=vmem, size = 0x200, scoped, tag = 'scratch operand']
  #allocation5 [shape = 'f32[1,128]{1,0:T(1,128)}', space=vmem, size = 0x200, scoped, tag = 'scratch operand']
  %s0 = inlined_call_operand.vmem [shape: f32[32,16], index: 0, kind: input, shape index: {}]
  %s1 = inlined_call_operand.vmem [shape: f32[32,16], index: 1, kind: input, shape index: {}]
  %s2 = inlined_call_operand.vmem [shape: f32[16,128], index: 2, kind: input, shape index: {}]
  %s3 = inlined_call_operand.vmem [shape: f32[1,128], index: 3, kind: input, shape index: {}]
  %s4 = inlined_call_operand.vmem [shape: f32[16,256], index: 4, kind: input, shape index: {}]
  %s5 = inlined_call_operand.vmem [shape: f32[1,256], index: 5, kind: input, shape index: {}]
  %s6 = inlined_call_operand.hbm [shape: f32[2,128,128], index: 6, kind: output, shape index: {0}]
  %s7 = inlined_call_operand.hbm [shape: f32[2,1,128], index: 7, kind: output, shape index: {1}]
  %s8 = inlined_call_operand.hbm [shape: f32[2,1,128], index: 8, kind: output, shape index: {2}]
  %s9 = inlined_call_operand.hbm [shape: f32[2,1,128], index: 9, kind: output, shape index: {3}]
  %10 = xla_tuple %s6, %s7, %s8, %s9
  %s11 = sld [smem:[#allocation0]]
  $region89: #{tpu_custom_call.1} parent=0
    _
  %s13 = ssub.s32 1, %s11
  %s14 = scalar_select 0, %s13, %s11
  $region1: #{tpu_custom_call.1} parent=0
    #allocation6 [shape = 'u8[131072]{0}', space=vmem, size = 0x20000, scoped, tag = 'output window, operand 0']
    #allocation7 [shape = 's32[2]{0}', space=sflag, size = 0x8, scoped, tag = 'scoped memory for tpu_custom_call.1']
    #allocation8 [shape = 'u8[1024]{0}', space=vmem, size = 0x400, scoped, tag = 'output window, operand 1']
    #allocation9 [shape = 's32[2]{0}', space=sflag, size = 0x8, scoped, tag = 'scoped memory for tpu_custom_call.1']
    #allocation10 [shape = 'u8[1024]{0}', space=vmem, size = 0x400, scoped, tag = 'output window, operand 2']
    #allocation11 [shape = 'u8[1024]{0}', space=vmem, size = 0x400, scoped, tag = 'output window, operand 3']
    #allocation12 [shape = 's32[2]{0}', space=sflag, size = 0x8, scoped, tag = 'scoped memory for tpu_custom_call.1']
    %15 = vsyncpa [#allocation7], 0
    %s16 = scalar_lea.sflag [#allocation7], 1
    %17 = vsyncpa %s16, 0
    %18 = vsyncpa [#allocation9], 0
    %s19 = scalar_lea.sflag [#allocation9], 1
    %20 = vsyncpa %s19, 0
    %21 = vsyncpa [#allocation12], 0
    %s22 = scalar_lea.sflag [#allocation12], 1
    %23 = vsyncpa %s22, 0
    loop: start=0, step=1, limit=6
    $region2: #{tpu_custom_call.1} parent=1 // loop_pre_header
      _
    $region3: #{tpu_custom_call.1} parent=1 // loop_header
      %s25 = sphi 0, %s29
      %p26 = scmp.ge.s32.totalorder %s25, 6
      %s32 = sphi 0, %s44
      %s33 = sphi 0, %s40
      %s34 = sphi 0, %s32
      %s35 = sphi 0, %s33
      %s36 = sphi 0, %s34
      %s37 = sphi 0, %s35
      %s51 = sphi 0, %s53
      %s54 = sphi 0, %s51
      %s55 = sphi 0, %s54
      %s71 = sphi 0, %s55
      %s81 = sphi 0, %s83
      %s84 = sphi 0, %s81
      %s85 = sphi 0, %s84
      %s101 = sphi 0, %s85
      %s105 = sphi 0, %s105
      %s107 = sphi 0, %s105
      %s108 = sphi 0, %s107
      %s122 = sphi 0, %s108
      %s126 = sphi 0, %s126
      %s128 = sphi 0, %s126
      %s129 = sphi 0, %s128
      %s143 = sphi 0, %s129
      %s147 = sphi 0, %s147
      %s149 = sphi 0, %s147
      %s150 = sphi 0, %s149
      %s164 = sphi 0, %s150
      %s168 = sphi 0, %s168
      %s170 = sphi 0, %s168
      %s171 = sphi 0, %s170
      %s185 = sphi 0, %s171
      %s191 = sphi 0, %s193
      %s194 = sphi 0, %s191
      %s195 = sphi 0, %s194
      %s211 = sphi 0, %s195
      %s217 = sphi 0, %s219
      %s220 = sphi 0, %s217
      %s221 = sphi 0, %s220
      %s237 = sphi 0, %s221
      %s243 = sphi 0, %s245
      %s246 = sphi 0, %s243
      %s247 = sphi 0, %s246
      %s263 = sphi 0, %s247
      %s269 = sphi 0, %s271
      %s272 = sphi 0, %s269
      %s273 = sphi 0, %s272
      %s289 = sphi 0, %s273
    $region4: #{tpu_custom_call.1} parent=1 // loop_header_branch
      %28 = sbr.rel (%p26) target = $region8
    $region5: #{tpu_custom_call.1} parent=1 // loop_body
      %s30 = ssub.s32 %s25, 1
      %s31 = ssub.s32 %s25, 2
      %s38 = sadd.s32 1, %s33
      %p39 = scmp.ge.s32.totalorder %s38, 2
      %s40 = scalar_select %p39, 0, %s38
      %s41 = sadd.s32 1, %s32
      %s42 = scalar_select %p39, %s41, %s32
      %p43 = scmp.ge.s32.totalorder %s42, 2
      %s44 = scalar_select %p43, 0, %s42
      %s45 = smul.u32 %s32, 2
      %s46 = sadd.s32 %s45, %s33
      %s47 = smul.u32 %s44, 2
      %s48 = sadd.s32 %s47, %s40
      %s49 = ssub.s32 %s46, %s48
      %p50 = scmp.eq.s32.totalorder %s49, 0
      %s52 = sadd.s32 %s51, 1
      %s53 = scalar_select %p50, %s51, %s52
      %p56 = pneg %p50
      %p57 = scmp.eq.s32.totalorder %s25, 3
      %p58 = por %p56, %p57
      %p59 = scmp.ne.s32.totalorder %s51, %s54
      %p60 = scmp.eq.s32.totalorder %s25, 0
      %p61 = por %p59, %p60
      %p62 = scmp.ne.s32.totalorder %s51, %s54
      %p63 = scmp.eq.s32.totalorder %s30, 3
      %p64 = por %p62, %p63
      %p65 = scmp.ne.s32.totalorder %s54, %s55
      %p66 = scmp.eq.s32.totalorder %s30, 0
      %p67 = por %p65, %p66
      %p68 = scmp.ne.s32.totalorder %s54, %s55
      %p69 = scmp.eq.s32.totalorder %s31, 3
      %p70 = por %p68, %p69
      %p72 = scmp.ne.s32.totalorder %s55, %s71
      %p73 = scmp.eq.s32.totalorder %s31, 0
      %p74 = por %p72, %p73
      %s75 = smul.u32 %s32, 2
      %s76 = sadd.s32 %s75, %s33
      %s77 = smul.u32 %s44, 2
      %s78 = sadd.s32 %s77, %s40
      %s79 = ssub.s32 %s76, %s78
      %p80 = scmp.eq.s32.totalorder %s79, 0
      %s82 = sadd.s32 %s81, 1
      %s83 = scalar_select %p80, %s81, %s82
      %p86 = pneg %p80
      %p87 = scmp.eq.s32.totalorder %s25, 3
      %p88 = por %p86, %p87
      %p89 = scmp.ne.s32.totalorder %s81, %s84
      %p90 = scmp.eq.s32.totalorder %s25, 0
      %p91 = por %p89, %p90
      %p92 = scmp.ne.s32.totalorder %s81, %s84
      %p93 = scmp.eq.s32.totalorder %s30, 3
      %p94 = por %p92, %p93
      %p95 = scmp.ne.s32.totalorder %s84, %s85
      %p96 = scmp.eq.s32.totalorder %s30, 0
      %p97 = por %p95, %p96
      %p98 = scmp.ne.s32.totalorder %s84, %s85
      %p99 = scmp.eq.s32.totalorder %s31, 3
      %p100 = por %p98, %p99
      %p102 = scmp.ne.s32.totalorder %s85, %s101
      %p103 = scmp.eq.s32.totalorder %s31, 0
      %p104 = por %p102, %p103
      %s106 = sadd.s32 %s105, 1
      %p109 = scmp.eq.s32.totalorder %s25, 3
      %p110 = scmp.ne.s32.totalorder %s105, %s107
      %p111 = scmp.eq.s32.totalorder %s25, 0
      %p112 = por %p110, %p111
      %p113 = scmp.ne.s32.totalorder %s105, %s107
      %p114 = scmp.eq.s32.totalorder %s30, 3
      %p115 = por %p113, %p114
      %p116 = scmp.ne.s32.totalorder %s107, %s108
      %p117 = scmp.eq.s32.totalorder %s30, 0
      %p118 = por %p116, %p117
      %p119 = scmp.ne.s32.totalorder %s107, %s108
      %p120 = scmp.eq.s32.totalorder %s31, 3
      %p121 = por %p119, %p120
      %p123 = scmp.ne.s32.totalorder %s108, %s122
      %p124 = scmp.eq.s32.totalorder %s31, 0
      %p125 = por %p123, %p124
      %s127 = sadd.s32 %s126, 1
      %p130 = scmp.eq.s32.totalorder %s25, 3
      %p131 = scmp.ne.s32.totalorder %s126, %s128
      %p132 = scmp.eq.s32.totalorder %s25, 0
      %p133 = por %p131, %p132
      %p134 = scmp.ne.s32.totalorder %s126, %s128
      %p135 = scmp.eq.s32.totalorder %s30, 3
      %p136 = por %p134, %p135
      %p137 = scmp.ne.s32.totalorder %s128, %s129
      %p138 = scmp.eq.s32.totalorder %s30, 0
      %p139 = por %p137, %p138
      %p140 = scmp.ne.s32.totalorder %s128, %s129
      %p141 = scmp.eq.s32.totalorder %s31, 3
      %p142 = por %p140, %p141
      %p144 = scmp.ne.s32.totalorder %s129, %s143
      %p145 = scmp.eq.s32.totalorder %s31, 0
      %p146 = por %p144, %p145
      %s148 = sadd.s32 %s147, 1
      %p151 = scmp.eq.s32.totalorder %s25, 3
      %p152 = scmp.ne.s32.totalorder %s147, %s149
      %p153 = scmp.eq.s32.totalorder %s25, 0
      %p154 = por %p152, %p153
      %p155 = scmp.ne.s32.totalorder %s147, %s149
      %p156 = scmp.eq.s32.totalorder %s30, 3
      %p157 = por %p155, %p156
      %p158 = scmp.ne.s32.totalorder %s149, %s150
      %p159 = scmp.eq.s32.totalorder %s30, 0
      %p160 = por %p158, %p159
      %p161 = scmp.ne.s32.totalorder %s149, %s150
      %p162 = scmp.eq.s32.totalorder %s31, 3
      %p163 = por %p161, %p162
      %p165 = scmp.ne.s32.totalorder %s150, %s164
      %p166 = scmp.eq.s32.totalorder %s31, 0
      %p167 = por %p165, %p166
      %s169 = sadd.s32 %s168, 1
      %p172 = scmp.eq.s32.totalorder %s25, 3
      %p173 = scmp.ne.s32.totalorder %s168, %s170
      %p174 = scmp.eq.s32.totalorder %s25, 0
      %p175 = por %p173, %p174
      %p176 = scmp.ne.s32.totalorder %s168, %s170
      %p177 = scmp.eq.s32.totalorder %s30, 3
      %p178 = por %p176, %p177
      %p179 = scmp.ne.s32.totalorder %s170, %s171
      %p180 = scmp.eq.s32.totalorder %s30, 0
      %p181 = por %p179, %p180
      %p182 = scmp.ne.s32.totalorder %s170, %s171
      %p183 = scmp.eq.s32.totalorder %s31, 3
      %p184 = por %p182, %p183
      %p186 = scmp.ne.s32.totalorder %s171, %s185
      %p187 = scmp.eq.s32.totalorder %s31, 0
      %p188 = por %p186, %p187
      %s189 = ssub.s32 %s32, %s44
      %p190 = scmp.eq.s32.totalorder %s189, 0
      %s192 = sadd.s32 %s191, 1
      %s193 = scalar_select %p190, %s191, %s192
      %p196 = pneg %p190
      %p197 = scmp.eq.s32.totalorder %s25, 3
      %p198 = por %p196, %p197
      %p199 = scmp.ne.s32.totalorder %s191, %s194
      %p200 = scmp.eq.s32.totalorder %s25, 0
      %p201 = por %p199, %p200
      %p202 = scmp.ne.s32.totalorder %s191, %s194
      %p203 = scmp.eq.s32.totalorder %s30, 3
      %p204 = por %p202, %p203
      %p205 = scmp.ne.s32.totalorder %s194, %s195
      %p206 = scmp.eq.s32.totalorder %s30, 0
      %p207 = por %p205, %p206
      %p208 = scmp.ne.s32.totalorder %s194, %s195
      %p209 = scmp.eq.s32.totalorder %s31, 3
      %p210 = por %p208, %p209
      %p212 = scmp.ne.s32.totalorder %s195, %s211
      %p213 = scmp.eq.s32.totalorder %s31, 0
      %p214 = por %p212, %p213
      %s215 = ssub.s32 %s32, %s44
      %p216 = scmp.eq.s32.totalorder %s215, 0
      %s218 = sadd.s32 %s217, 1
      %s219 = scalar_select %p216, %s217, %s218
      %p222 = pneg %p216
      %p223 = scmp.eq.s32.totalorder %s25, 3
      %p224 = por %p222, %p223
      %p225 = scmp.ne.s32.totalorder %s217, %s220
      %p226 = scmp.eq.s32.totalorder %s25, 0
      %p227 = por %p225, %p226
      %p228 = scmp.ne.s32.totalorder %s217, %s220
      %p229 = scmp.eq.s32.totalorder %s30, 3
      %p230 = por %p228, %p229
      %p231 = scmp.ne.s32.totalorder %s220, %s221
      %p232 = scmp.eq.s32.totalorder %s30, 0
      %p233 = por %p231, %p232
      %p234 = scmp.ne.s32.totalorder %s220, %s221
      %p235 = scmp.eq.s32.totalorder %s31, 3
      %p236 = por %p234, %p235
      %p238 = scmp.ne.s32.totalorder %s221, %s237
      %p239 = scmp.eq.s32.totalorder %s31, 0
      %p240 = por %p238, %p239
      %s241 = ssub.s32 %s32, %s44
      %p242 = scmp.eq.s32.totalorder %s241, 0
      %s244 = sadd.s32 %s243, 1
      %s245 = scalar_select %p242, %s243, %s244
      %p248 = pneg %p242
      %p249 = scmp.eq.s32.totalorder %s25, 3
      %p250 = por %p248, %p249
      %p251 = scmp.ne.s32.totalorder %s243, %s246
      %p252 = scmp.eq.s32.totalorder %s25, 0
      %p253 = por %p251, %p252
      %p254 = scmp.ne.s32.totalorder %s243, %s246
      %p255 = scmp.eq.s32.totalorder %s30, 3
      %p256 = por %p254, %p255
      %p257 = scmp.ne.s32.totalorder %s246, %s247
      %p258 = scmp.eq.s32.totalorder %s30, 0
      %p259 = por %p257, %p258
      %p260 = scmp.ne.s32.totalorder %s246, %s247
      %p261 = scmp.eq.s32.totalorder %s31, 3
      %p262 = por %p260, %p261
      %p264 = scmp.ne.s32.totalorder %s247, %s263
      %p265 = scmp.eq.s32.totalorder %s31, 0
      %p266 = por %p264, %p265
      %s267 = ssub.s32 %s32, %s44
      %p268 = scmp.eq.s32.totalorder %s267, 0
      %s270 = sadd.s32 %s269, 1
      %s271 = scalar_select %p268, %s269, %s270
      %p274 = pneg %p268
      %p275 = scmp.eq.s32.totalorder %s25, 3
      %p276 = por %p274, %p275
      %p277 = scmp.ne.s32.totalorder %s269, %s272
      %p278 = scmp.eq.s32.totalorder %s25, 0
      %p279 = por %p277, %p278
      %p280 = scmp.ne.s32.totalorder %s269, %s272
      %p281 = scmp.eq.s32.totalorder %s30, 3
      %p282 = por %p280, %p281
      %p283 = scmp.ne.s32.totalorder %s272, %s273
      %p284 = scmp.eq.s32.totalorder %s30, 0
      %p285 = por %p283, %p284
      %p286 = scmp.ne.s32.totalorder %s272, %s273
      %p287 = scmp.eq.s32.totalorder %s31, 3
      %p288 = por %p286, %p287
      %p290 = scmp.ne.s32.totalorder %s273, %s289
      %p291 = scmp.eq.s32.totalorder %s31, 0
      %p292 = por %p290, %p291
      %p293 = scmp.le.s32.totalorder 1, %s25
      %p294 = scmp.lt.s32.totalorder %s25, 5
      %p295 = pnand %p293, %p294
      %p296 = pneg %p295
      // Predicated region
      $region9: #{tpu_custom_call.1} parent=5 // pred_check
        _
      $region10: #{tpu_custom_call.1} parent=5 // pred_check_branch
        %298 = sbr.rel (%p295) target = $region12
      $region11: #{tpu_custom_call.1} parent=5 // pred_region
        %s299 = ssub.s32 %s25, 1
        // Predicated region
        $region13: #{tpu_custom_call.1} parent=11 // pred_check
          %p300 = pneg %p118
        $region14: #{tpu_custom_call.1} parent=11 // pred_check_branch
          %302 = sbr.rel (%p300) target = $region16
        $region15: #{tpu_custom_call.1} parent=11 // pred_region
          _
        $region16: #{tpu_custom_call.1} parent=11 // pred_fallthru
          _
        // Predicated region
        $region17: #{tpu_custom_call.1} parent=11 // pred_check
          %p303 = pneg %p139
        $region18: #{tpu_custom_call.1} parent=11 // pred_check_branch
          %305 = sbr.rel (%p303) target = $region20
        $region19: #{tpu_custom_call.1} parent=11 // pred_region
          _
        $region20: #{tpu_custom_call.1} parent=11 // pred_fallthru
          _
        // Predicated region
        $region21: #{tpu_custom_call.1} parent=11 // pred_check
          %p306 = pneg %p160
        $region22: #{tpu_custom_call.1} parent=11 // pred_check_branch
          %308 = sbr.rel (%p306) target = $region24
        $region23: #{tpu_custom_call.1} parent=11 // pred_region
          _
        $region24: #{tpu_custom_call.1} parent=11 // pred_fallthru
          _
        // Predicated region
        $region25: #{tpu_custom_call.1} parent=11 // pred_check
          %p309 = pneg %p181
        $region26: #{tpu_custom_call.1} parent=11 // pred_check_branch
          %311 = sbr.rel (%p309) target = $region28
        $region27: #{tpu_custom_call.1} parent=11 // pred_region
          _
        $region28: #{tpu_custom_call.1} parent=11 // pred_fallthru
          _
      $region12: #{tpu_custom_call.1} parent=5 // pred_fallthru
        _
      %p312 = scmp.lt.s32.totalorder %s25, 4
      // Predicated region
      $region29: #{tpu_custom_call.1} parent=5 // pred_check
        %p313 = pneg %p312
      $region30: #{tpu_custom_call.1} parent=5 // pred_check_branch
        %315 = sbr.rel (%p313) target = $region32
      $region31: #{tpu_custom_call.1} parent=5 // pred_region
        // Predicated region
        $region33: #{tpu_custom_call.1} parent=31 // pred_check
          %p316 = pneg %p61
        $region34: #{tpu_custom_call.1} parent=31 // pred_check_branch
          %318 = sbr.rel (%p316) target = $region36
        $region35: #{tpu_custom_call.1} parent=31 // pred_region
          %s319 = smul.u32 %s32, 2
          %s320 = sadd.s32 %s319, %s33
          %p321 = scmp.lt.s32.totalorder %s320, 3
          %s322 = scalar_select %p321, %s320, 3
          %s323 = smul.addr %s322, 8
          %s324 = scalar_lea.vmem %s0, %s323
          %s325 = smul.u32 %s32, 2
          %s326 = sadd.s32 %s325, %s33
        $region36: #{tpu_custom_call.1} parent=31 // pred_fallthru
          _
        // Predicated region
        $region37: #{tpu_custom_call.1} parent=31 // pred_check
          %p327 = pneg %p91
        $region38: #{tpu_custom_call.1} parent=31 // pred_check_branch
          %329 = sbr.rel (%p327) target = $region40
        $region39: #{tpu_custom_call.1} parent=31 // pred_region
          %s330 = smul.u32 %s32, 2
          %s331 = sadd.s32 %s330, %s33
          %p332 = scmp.lt.s32.totalorder %s331, 3
          %s333 = scalar_select %p332, %s331, 3
          %s334 = smul.addr %s333, 8
          %s335 = scalar_lea.vmem %s1, %s334
          %s336 = smul.u32 %s32, 2
          %s337 = sadd.s32 %s336, %s33
        $region40: #{tpu_custom_call.1} parent=31 // pred_fallthru
          _
      $region32: #{tpu_custom_call.1} parent=5 // pred_fallthru
        _
      %p338 = scmp.le.s32.totalorder 1, %s25
      %p339 = scmp.lt.s32.totalorder %s25, 5
      %p340 = pnand %p338, %p339
      %p341 = pneg %p340
      // Predicated region
      $region41: #{tpu_custom_call.1} parent=5 // pred_check
        _
      $region42: #{tpu_custom_call.1} parent=5 // pred_check_branch
        %343 = sbr.rel (%p340) target = $region44
      $region43: #{tpu_custom_call.1} parent=5 // pred_region
        %s344 = ssub.s32 %s25, 1
        %s345 = smul.u32 %s34, 2
        %s346 = sadd.s32 %s345, %s35
        %p347 = scmp.lt.s32.totalorder %s346, 3
        %s348 = scalar_select %p347, %s346, 3
        %s349 = smul.addr %s348, 8
        %s350 = scalar_lea.vmem %s0, %s349
        %p351 = pneg %p67
        %p352 = pneg %p64
        %s353 = smul.u32 %s34, 2
        %s354 = sadd.s32 %s353, %s35
        %p355 = scmp.lt.s32.totalorder %s354, 3
        %s356 = scalar_select %p355, %s354, 3
        %s357 = smul.addr %s356, 8
        %s358 = scalar_lea.vmem %s1, %s357
        %p359 = pneg %p97
        %p360 = pneg %p94
        %p361 = pneg %p118
        %p362 = pneg %p115
        %p363 = pneg %p139
        %p364 = pneg %p136
        %p365 = pneg %p160
        %p366 = pneg %p157
        %p367 = pneg %p181
        %p368 = pneg %p178
        %p369 = pneg %p207
        %p370 = pneg %p204
        %s371 = sand.u32 %s194, 1
        %s372 = scalar_lea.sflag [#allocation7], %s371
        %s373 = sand.u32 %s194, 1
        %s374 = smul.addr %s373, 128
        %s375 = scalar_lea.vmem [#allocation6], %s374
        %p376 = pneg %p233
        %p377 = pneg %p230
        %s378 = sand.u32 %s30, 1
        %s379 = scalar_lea.sflag [#allocation9], %s378
        %s380 = sand.u32 %s220, 1
        %s381 = scalar_lea.vmem [#allocation8], %s380
        %p382 = pneg %p259
        %p383 = pneg %p256
        %s384 = sand.u32 %s30, 1
        %s385 = scalar_lea.sflag [#allocation9], %s384
        %s386 = sand.u32 %s246, 1
        %s387 = scalar_lea.vmem [#allocation10], %s386
        %p388 = pneg %p285
        %p389 = pneg %p282
        %s390 = sand.u32 %s272, 1
        %s391 = scalar_lea.sflag [#allocation12], %s390
        %s392 = sand.u32 %s272, 1
        %s393 = scalar_lea.vmem [#allocation11], %s392
        %s394 = smul.u32 %s34, 2
        %s395 = sadd.s32 %s394, %s35
        %p396 = scmp.lt.s32.totalorder %s395, 3
        %s397 = scalar_select %p396, %s395, 3
        %s398 = smul.addr %s397, 8
        %s399 = scalar_lea.vmem %s0, %s398
        %s400 = smul.u32 %s34, 2
        %s401 = sadd.s32 %s400, %s35
        %s402 = smul.u32 %s34, 2
        %s403 = sadd.s32 %s402, %s35
        %p404 = scmp.lt.s32.totalorder %s403, 3
        %s405 = scalar_select %p404, %s403, 3
        %s406 = smul.addr %s405, 8
        %s407 = scalar_lea.vmem %s1, %s406
        %s408 = smul.u32 %s34, 2
        %s409 = sadd.s32 %s408, %s35
        %p410 = scmp.eq.s32.totalorder %s35, 0
        // Predicated region
        $region45: #{tpu_custom_call.1} parent=43 // pred_check
          %p411 = pneg %p410
        $region46: #{tpu_custom_call.1} parent=43 // pred_check_branch
          %413 = sbr.rel (%p411) target = $region48
        $region47: #{tpu_custom_call.1} parent=43 // pred_region
          %414 = vst [vmem:[#allocation2] sm:$0xff] 0.0
          %415 = vst [vmem:[#allocation2 + $0x8] sm:$0xff] 0.0
          %416 = vst [vmem:[#allocation2 + $0x10] sm:$0xff] 0.0
          %417 = vst [vmem:[#allocation2 + $0x18] sm:$0xff] 0.0
          %418 = vst [vmem:[#allocation2 + $0x20] sm:$0xff] 0.0
          %419 = vst [vmem:[#allocation2 + $0x28] sm:$0xff] 0.0
          %420 = vst [vmem:[#allocation2 + $0x30] sm:$0xff] 0.0
          %421 = vst [vmem:[#allocation2 + $0x38] sm:$0xff] 0.0
          %422 = vst [vmem:[#allocation2 + $0x40] sm:$0xff] 0.0
          %423 = vst [vmem:[#allocation2 + $0x48] sm:$0xff] 0.0
          %424 = vst [vmem:[#allocation2 + $0x50] sm:$0xff] 0.0
          %425 = vst [vmem:[#allocation2 + $0x58] sm:$0xff] 0.0
          %426 = vst [vmem:[#allocation2 + $0x60] sm:$0xff] 0.0
          %427 = vst [vmem:[#allocation2 + $0x68] sm:$0xff] 0.0
          %428 = vst [vmem:[#allocation2 + $0x70] sm:$0xff] 0.0
          %429 = vst [vmem:[#allocation2 + $0x78] sm:$0xff] 0.0
          %430 = vst [vmem:[#allocation3] sm:$0x1] 0.0
          %431 = vst [vmem:[#allocation4] sm:$0x1] 0.0
          %432 = vst [vmem:[#allocation5] sm:$0x1] 0.0
        $region48: #{tpu_custom_call.1} parent=43 // pred_fallthru
          _
        %v433 = vld [vmem:[%s399] sm:$0xff]
        %v434 = vld [vmem:[%s2] sm:$0xff]
        %v435 = vld [vmem:[%s2 + $0x8] sm:$0xff]
        %v436 = vld [vmem:[%s3] sm:$0x1]
        %v438 = vperm.slane %v436, 0
        %vm440 = vcmask 130048
        %v442 = vsel %vm440, %v433, 0
        %444 = vmatpush.msra.mxu0 0.0
        %445 = vmatpush.msra.mxu0 0.0
        %446 = vmatpush.msra.mxu0 0.0
        %447 = vmatpush.msra.mxu0 0.0
        %448 = vmatpush.msra.mxu0 0.0
        %449 = vmatpush.msra.mxu0 0.0
        %450 = vmatpush.msra.mxu0 0.0
        %451 = vmatpush.msra.mxu0 0.0
        %452 = vmatpush.msra.mxu0 0.0
        %453 = vmatpush.msra.mxu0 0.0
        %454 = vmatpush.msra.mxu0 0.0
        %455 = vmatpush.msra.mxu0 0.0
        %456 = vmatpush.msra.mxu0 0.0
        %457 = vmatpush.msra.mxu0 0.0
        %458 = vmatpush.msra.mxu0 %v435
        %459 = vmatpush.msra.mxu0 %v434
        %460 = vmatmul.f32.gmra.mxu0 %v442
        %v461 = vpop.f32.mrf.mxu0
        %v462 = vadd.f32 %v438, %v461
        %463 = vdwg.mxu0
        %v464 = vld [vmem:[%s407] sm:$0xff]
        %v465 = vld [vmem:[%s4] sm:$0xff]
        %v466 = vld [vmem:[%s4 + $0x8] sm:$0xff]
        %v467 = vld [vmem:[%s4 + $0x10] sm:$0xff]
        %v468 = vld [vmem:[%s4 + $0x18] sm:$0xff]
        %v469 = vld [vmem:[%s5] sm:$0x3]
        %v471 = vperm.slane %v469, 0
        %v472 = vperm.slane %v469, 1
        %v476 = vsel %vm440, %v464, 0
        %478 = vmatpush.msra.mxu0 0.0
        %479 = vmatpush.msra.mxu0 0.0
        %480 = vmatpush.msra.mxu0 0.0
        %481 = vmatpush.msra.mxu0 0.0
        %482 = vmatpush.msra.mxu0 0.0
        %483 = vmatpush.msra.mxu0 0.0
        %484 = vmatpush.msra.mxu0 0.0
        %485 = vmatpush.msra.mxu0 0.0
        %486 = vmatpush.msra.mxu0 0.0
        %487 = vmatpush.msra.mxu0 0.0
        %488 = vmatpush.msra.mxu0 0.0
        %489 = vmatpush.msra.mxu0 0.0
        %490 = vmatpush.msra.mxu0 0.0
        %491 = vmatpush.msra.mxu0 0.0
        %492 = vmatpush.msra.mxu0 %v467
        %493 = vmatpush.msra.mxu0 %v465
        %494 = vmatmul.f32.gmra.mxu0 %v476
        %v495 = vpop.f32.mrf.mxu0
        %v496 = vadd.f32 %v471, %v495
        %497 = vdwg.mxu0
        %498 = vmatpush.msra.mxu0 0.0
        %499 = vmatpush.msra.mxu0 0.0
        %500 = vmatpush.msra.mxu0 0.0
        %501 = vmatpush.msra.mxu0 0.0
        %502 = vmatpush.msra.mxu0 0.0
        %503 = vmatpush.msra.mxu0 0.0
        %504 = vmatpush.msra.mxu0 0.0
        %505 = vmatpush.msra.mxu0 0.0
        %506 = vmatpush.msra.mxu0 0.0
        %507 = vmatpush.msra.mxu0 0.0
        %508 = vmatpush.msra.mxu0 0.0
        %509 = vmatpush.msra.mxu0 0.0
        %510 = vmatpush.msra.mxu0 0.0
        %511 = vmatpush.msra.mxu0 0.0
        %512 = vmatpush.msra.mxu0 %v468
        %513 = vmatpush.msra.mxu0 %v466
        %514 = vmatmul.f32.gmra.mxu0 %v476
        %v515 = vpop.f32.mrf.mxu0
        %v516 = vadd.f32 %v472, %v515
        %517 = vdwg.mxu0
        %s518 = smul.u32 %s34, 2
        %s519 = sadd.s32 %s518, %s35
        %s520 = smul.u32 %s519, 8
        %v521 = vlaneseq
        %v522 = vshrl.u32 %v521, 7
        %v523 = vstv %s520
        %v524 = vadd.s32 %v523, %v522
        %vm525 = vcmp.lt.s32.totalorder %v524, 20
        %v526 = vsel %vm525, 1, 0
        %v527 = vcvt.s32.f32 %v526
        %v528 = vmul.f32 %v462, %v527
        %v529 = vmul.f32 %v496, %v527
        %v530 = vld [vmem:[#allocation3] sm:$0x1]
        %v531 = vmul.f32 %v528, %v528
        %v532 = vrot.slane %v531, 4
        %v533 = vadd.f32 %v531, %v532
        %v534 = vrot.slane %v533, 2
        %v535 = vadd.f32 %v533, %v534
        %v536 = vrot.slane %v535, 1
        %v537 = vadd.f32 %v535, %v536
        %v538 = vadd.f32 %v530, %v537
        %539 = vst [vmem:[#allocation3] sm:$0x1] %v538
        %v540 = vld [vmem:[#allocation4] sm:$0x1]
        %v541 = vmul.f32 %v529, %v529
        %v542 = vrot.slane %v541, 4
        %v543 = vadd.f32 %v541, %v542
        %v544 = vrot.slane %v543, 2
        %v545 = vadd.f32 %v543, %v544
        %v546 = vrot.slane %v545, 1
        %v547 = vadd.f32 %v545, %v546
        %v548 = vadd.f32 %v540, %v547
        %549 = vst [vmem:[#allocation4] sm:$0x1] %v548
        %v550 = vld [vmem:[#allocation5] sm:$0x1]
        %v551 = vrot.slane %v529, 4
        %v552 = vadd.f32 %v529, %v551
        %v553 = vrot.slane %v552, 2
        %v554 = vadd.f32 %v552, %v553
        %v555 = vrot.slane %v554, 1
        %v556 = vadd.f32 %v554, %v555
        %v557 = vadd.f32 %v550, %v556
        %558 = vst [vmem:[#allocation5] sm:$0x1] %v557
        %v559 = vld [vmem:[#allocation2] sm:$0xff]
        %v560 = vld [vmem:[#allocation2 + $0x8] sm:$0xff]
        %v561 = vld [vmem:[#allocation2 + $0x10] sm:$0xff]
        %v562 = vld [vmem:[#allocation2 + $0x18] sm:$0xff]
        %v563 = vld [vmem:[#allocation2 + $0x20] sm:$0xff]
        %v564 = vld [vmem:[#allocation2 + $0x28] sm:$0xff]
        %v565 = vld [vmem:[#allocation2 + $0x30] sm:$0xff]
        %v566 = vld [vmem:[#allocation2 + $0x38] sm:$0xff]
        %v567 = vld [vmem:[#allocation2 + $0x40] sm:$0xff]
        %v568 = vld [vmem:[#allocation2 + $0x48] sm:$0xff]
        %v569 = vld [vmem:[#allocation2 + $0x50] sm:$0xff]
        %v570 = vld [vmem:[#allocation2 + $0x58] sm:$0xff]
        %v571 = vld [vmem:[#allocation2 + $0x60] sm:$0xff]
        %v572 = vld [vmem:[#allocation2 + $0x68] sm:$0xff]
        %v573 = vld [vmem:[#allocation2 + $0x70] sm:$0xff]
        %v574 = vld [vmem:[#allocation2 + $0x78] sm:$0xff]
        %575 = vxpose.xlu0.b32.start [1/16] %v529, 128
        %576 = vxpose.xlu0.b32.cont [2/16] 0.0, 128
        %577 = vxpose.xlu0.b32.cont [3/16] 0.0, 128
        %578 = vxpose.xlu0.b32.cont [4/16] 0.0, 128
        %579 = vxpose.xlu0.b32.cont [5/16] 0.0, 128
        %580 = vxpose.xlu0.b32.cont [6/16] 0.0, 128
        %581 = vxpose.xlu0.b32.cont [7/16] 0.0, 128
        %582 = vxpose.xlu0.b32.cont [8/16] 0.0, 128
        %583 = vxpose.xlu0.b32.cont [9/16] 0.0, 128
        %584 = vxpose.xlu0.b32.cont [10/16] 0.0, 128
        %585 = vxpose.xlu0.b32.cont [11/16] 0.0, 128
        %586 = vxpose.xlu0.b32.cont [12/16] 0.0, 128
        %587 = vxpose.xlu0.b32.cont [13/16] 0.0, 128
        %588 = vxpose.xlu0.b32.cont [14/16] 0.0, 128
        %589 = vxpose.xlu0.b32.cont [15/16] 0.0, 128
        %590 = vxpose.xlu0.b32.end [16/16] 0.0, 128
        %v591 = vpop.trf.xlu0
        %v592 = vpop.trf.xlu0
        %v593 = vpop.trf.xlu0
        %v594 = vpop.trf.xlu0
        %v595 = vpop.trf.xlu0
        %v596 = vpop.trf.xlu0
        %v597 = vpop.trf.xlu0
        %v598 = vpop.trf.xlu0
        %v599 = vpop.trf.xlu0
        %v600 = vpop.trf.xlu0
        %v601 = vpop.trf.xlu0
        %v602 = vpop.trf.xlu0
        %v603 = vpop.trf.xlu0
        %v604 = vpop.trf.xlu0
        %v605 = vpop.trf.xlu0
        %v606 = vpop.trf.xlu0
        %vm607 = vcmask 64512
        %v609 = vsel %vm607, %v591, 0
        %v612 = vsel %vm607, %v592, 0
        %v615 = vsel %vm607, %v593, 0
        %v618 = vsel %vm607, %v594, 0
        %v621 = vsel %vm607, %v595, 0
        %v624 = vsel %vm607, %v596, 0
        %v627 = vsel %vm607, %v597, 0
        %v630 = vsel %vm607, %v598, 0
        %v633 = vsel %vm607, %v599, 0
        %v636 = vsel %vm607, %v600, 0
        %v639 = vsel %vm607, %v601, 0
        %v642 = vsel %vm607, %v602, 0
        %v645 = vsel %vm607, %v603, 0
        %v648 = vsel %vm607, %v604, 0
        %v651 = vsel %vm607, %v605, 0
        %v654 = vsel %vm607, %v606, 0
        %656 = vmatpush.msra.mxu0 0.0
        %657 = vmatpush.msra.mxu0 0.0
        %658 = vmatpush.msra.mxu0 0.0
        %659 = vmatpush.msra.mxu0 0.0
        %660 = vmatpush.msra.mxu0 0.0
        %661 = vmatpush.msra.mxu0 0.0
        %662 = vmatpush.msra.mxu0 0.0
        %663 = vmatpush.msra.mxu0 0.0
        %664 = vmatpush.msra.mxu0 0.0
        %665 = vmatpush.msra.mxu0 0.0
        %666 = vmatpush.msra.mxu0 0.0
        %667 = vmatpush.msra.mxu0 0.0
        %668 = vmatpush.msra.mxu0 0.0
        %669 = vmatpush.msra.mxu0 0.0
        %670 = vmatpush.msra.mxu0 0.0
        %671 = vmatpush.msra.mxu0 %v516
        %672 = vmatmul.f32.gmra.mxu0 %v609
        %v673 = vpop.f32.mrf.mxu0
        %v674 = vadd.f32 0.0, %v673
        %675 = vmatmul.f32.gmra.mxu0 %v612
        %v676 = vpop.f32.mrf.mxu0
        %v677 = vadd.f32 0.0, %v676
        %678 = vmatmul.f32.gmra.mxu0 %v615
        %v679 = vpop.f32.mrf.mxu0
        %v680 = vadd.f32 0.0, %v679
        %681 = vmatmul.f32.gmra.mxu0 %v618
        %v682 = vpop.f32.mrf.mxu0
        %v683 = vadd.f32 0.0, %v682
        %684 = vmatmul.f32.gmra.mxu0 %v621
        %v685 = vpop.f32.mrf.mxu0
        %v686 = vadd.f32 0.0, %v685
        %687 = vmatmul.f32.gmra.mxu0 %v624
        %v688 = vpop.f32.mrf.mxu0
        %v689 = vadd.f32 0.0, %v688
        %690 = vmatmul.f32.gmra.mxu0 %v627
        %v691 = vpop.f32.mrf.mxu0
        %v692 = vadd.f32 0.0, %v691
        %693 = vmatmul.f32.gmra.mxu0 %v630
        %v694 = vpop.f32.mrf.mxu0
        %v695 = vadd.f32 0.0, %v694
        %696 = vmatmul.f32.gmra.mxu0 %v633
        %v697 = vpop.f32.mrf.mxu0
        %v698 = vadd.f32 0.0, %v697
        %699 = vmatmul.f32.gmra.mxu0 %v636
        %v700 = vpop.f32.mrf.mxu0
        %v701 = vadd.f32 0.0, %v700
        %702 = vmatmul.f32.gmra.mxu0 %v639
        %v703 = vpop.f32.mrf.mxu0
        %v704 = vadd.f32 0.0, %v703
        %705 = vmatmul.f32.gmra.mxu0 %v642
        %v706 = vpop.f32.mrf.mxu0
        %v707 = vadd.f32 0.0, %v706
        %708 = vmatmul.f32.gmra.mxu0 %v645
        %v709 = vpop.f32.mrf.mxu0
        %v710 = vadd.f32 0.0, %v709
        %711 = vmatmul.f32.gmra.mxu0 %v648
        %v712 = vpop.f32.mrf.mxu0
        %v713 = vadd.f32 0.0, %v712
        %714 = vmatmul.f32.gmra.mxu0 %v651
        %v715 = vpop.f32.mrf.mxu0
        %v716 = vadd.f32 0.0, %v715
        %717 = vmatmul.f32.gmra.mxu0 %v654
        %v718 = vpop.f32.mrf.mxu0
        %v719 = vadd.f32 0.0, %v718
        %720 = vdwg.mxu0
        %v721 = vadd.f32 %v559, %v674
        %v722 = vadd.f32 %v560, %v677
        %v723 = vadd.f32 %v561, %v680
        %v724 = vadd.f32 %v562, %v683
        %v725 = vadd.f32 %v563, %v686
        %v726 = vadd.f32 %v564, %v689
        %v727 = vadd.f32 %v565, %v692
        %v728 = vadd.f32 %v566, %v695
        %v729 = vadd.f32 %v567, %v698
        %v730 = vadd.f32 %v568, %v701
        %v731 = vadd.f32 %v569, %v704
        %v732 = vadd.f32 %v570, %v707
        %v733 = vadd.f32 %v571, %v710
        %v734 = vadd.f32 %v572, %v713
        %v735 = vadd.f32 %v573, %v716
        %v736 = vadd.f32 %v574, %v719
        %737 = vst [vmem:[#allocation2] sm:$0xff] %v721
        %738 = vst [vmem:[#allocation2 + $0x8] sm:$0xff] %v722
        %739 = vst [vmem:[#allocation2 + $0x10] sm:$0xff] %v723
        %740 = vst [vmem:[#allocation2 + $0x18] sm:$0xff] %v724
        %741 = vst [vmem:[#allocation2 + $0x20] sm:$0xff] %v725
        %742 = vst [vmem:[#allocation2 + $0x28] sm:$0xff] %v726
        %743 = vst [vmem:[#allocation2 + $0x30] sm:$0xff] %v727
        %744 = vst [vmem:[#allocation2 + $0x38] sm:$0xff] %v728
        %745 = vst [vmem:[#allocation2 + $0x40] sm:$0xff] %v729
        %746 = vst [vmem:[#allocation2 + $0x48] sm:$0xff] %v730
        %747 = vst [vmem:[#allocation2 + $0x50] sm:$0xff] %v731
        %748 = vst [vmem:[#allocation2 + $0x58] sm:$0xff] %v732
        %749 = vst [vmem:[#allocation2 + $0x60] sm:$0xff] %v733
        %750 = vst [vmem:[#allocation2 + $0x68] sm:$0xff] %v734
        %751 = vst [vmem:[#allocation2 + $0x70] sm:$0xff] %v735
        %752 = vst [vmem:[#allocation2 + $0x78] sm:$0xff] %v736
        %p753 = scmp.eq.s32.totalorder %s35, 1
        // Predicated region
        $region49: #{tpu_custom_call.1} parent=43 // pred_check
          %p754 = pneg %p753
        $region50: #{tpu_custom_call.1} parent=43 // pred_check_branch
          %756 = sbr.rel (%p754) target = $region52
        $region51: #{tpu_custom_call.1} parent=43 // pred_region
          %v757 = vld [vmem:[#allocation2] sm:$0xff]
          %v758 = vld [vmem:[#allocation2 + $0x8] sm:$0xff]
          %v759 = vld [vmem:[#allocation2 + $0x10] sm:$0xff]
          %v760 = vld [vmem:[#allocation2 + $0x18] sm:$0xff]
          %v761 = vld [vmem:[#allocation2 + $0x20] sm:$0xff]
          %v762 = vld [vmem:[#allocation2 + $0x28] sm:$0xff]
          %v763 = vld [vmem:[#allocation2 + $0x30] sm:$0xff]
          %v764 = vld [vmem:[#allocation2 + $0x38] sm:$0xff]
          %v765 = vld [vmem:[#allocation2 + $0x40] sm:$0xff]
          %v766 = vld [vmem:[#allocation2 + $0x48] sm:$0xff]
          %v767 = vld [vmem:[#allocation2 + $0x50] sm:$0xff]
          %v768 = vld [vmem:[#allocation2 + $0x58] sm:$0xff]
          %v769 = vld [vmem:[#allocation2 + $0x60] sm:$0xff]
          %v770 = vld [vmem:[#allocation2 + $0x68] sm:$0xff]
          %v771 = vld [vmem:[#allocation2 + $0x70] sm:$0xff]
          %v772 = vld [vmem:[#allocation2 + $0x78] sm:$0xff]
          %773 = vst [vmem:[%s375] sm:$0xff] %v757
          %774 = vst [vmem:[%s375 + $0x8] sm:$0xff] %v758
          %775 = vst [vmem:[%s375 + $0x10] sm:$0xff] %v759
          %776 = vst [vmem:[%s375 + $0x18] sm:$0xff] %v760
          %777 = vst [vmem:[%s375 + $0x20] sm:$0xff] %v761
          %778 = vst [vmem:[%s375 + $0x28] sm:$0xff] %v762
          %779 = vst [vmem:[%s375 + $0x30] sm:$0xff] %v763
          %780 = vst [vmem:[%s375 + $0x38] sm:$0xff] %v764
          %781 = vst [vmem:[%s375 + $0x40] sm:$0xff] %v765
          %782 = vst [vmem:[%s375 + $0x48] sm:$0xff] %v766
          %783 = vst [vmem:[%s375 + $0x50] sm:$0xff] %v767
          %784 = vst [vmem:[%s375 + $0x58] sm:$0xff] %v768
          %785 = vst [vmem:[%s375 + $0x60] sm:$0xff] %v769
          %786 = vst [vmem:[%s375 + $0x68] sm:$0xff] %v770
          %787 = vst [vmem:[%s375 + $0x70] sm:$0xff] %v771
          %788 = vst [vmem:[%s375 + $0x78] sm:$0xff] %v772
          %v789 = vld [vmem:[#allocation3] sm:$0x1]
          %790 = vst [vmem:[%s381] sm:$0x1] %v789
          %v791 = vld [vmem:[#allocation4] sm:$0x1]
          %792 = vst [vmem:[%s387] sm:$0x1] %v791
          %v793 = vld [vmem:[#allocation5] sm:$0x1]
          %794 = vst [vmem:[%s393] sm:$0x1] %v793
        $region52: #{tpu_custom_call.1} parent=43 // pred_fallthru
          _
        %s795 = sand.u32 %s194, 1
        %s796 = scalar_lea.sflag [#allocation7], %s795
        %s797 = sand.u32 %s194, 1
        %s798 = smul.addr %s797, 128
        %s799 = scalar_lea.vmem [#allocation6], %s798
        %s800 = sand.u32 %s30, 1
        %s801 = scalar_lea.sflag [#allocation9], %s800
        %s802 = sand.u32 %s220, 1
        %s803 = scalar_lea.vmem [#allocation8], %s802
        %s804 = sand.u32 %s30, 1
        %s805 = scalar_lea.sflag [#allocation9], %s804
        %s806 = sand.u32 %s246, 1
        %s807 = scalar_lea.vmem [#allocation10], %s806
        %s808 = sand.u32 %s272, 1
        %s809 = scalar_lea.sflag [#allocation12], %s808
        %s810 = sand.u32 %s272, 1
        %s811 = scalar_lea.vmem [#allocation11], %s810
        // Predicated region
        $region53: #{tpu_custom_call.1} parent=43 // pred_check
          %p812 = pneg %p204
        $region54: #{tpu_custom_call.1} parent=43 // pred_check_branch
          %814 = sbr.rel (%p812) target = $region56
        $region55: #{tpu_custom_call.1} parent=43 // pred_region
          %816 = vsyncadd %s796, 0
          %s817 = smul.addr %s34, 16
          %s818 = smul.addr %s817, 8
          %s819 = scalar_lea.hbm %s6, %s818
          %s820 = sshll.u32 %s799, 4
          %s821 = int_to_ptr.vmem [resolvable:$true] %s820
          %s822 = sshll.u32 %s819, 4
          %s823 = int_to_ptr.hbm [resolvable:$true] %s822
          %828 = dma.vmem_to_hbm [thread:$0]  %s821, 2048, %s823, %s796, 128, 128, 8
        $region56: #{tpu_custom_call.1} parent=43 // pred_fallthru
          _
        // Predicated region
        $region57: #{tpu_custom_call.1} parent=43 // pred_check
          %p829 = pneg %p230
        $region58: #{tpu_custom_call.1} parent=43 // pred_check_branch
          %831 = sbr.rel (%p829) target = $region60
        $region59: #{tpu_custom_call.1} parent=43 // pred_region
          %833 = vsyncadd %s801, 0
          %s834 = scalar_lea.hbm %s7, %s34
          %s836 = sshll.u32 %s803, 4
          %s837 = int_to_ptr.vmem [resolvable:$true] %s836
          %s838 = sshll.u32 %s834, 4
          %s839 = int_to_ptr.hbm [resolvable:$true] %s838
          %841 = dma.vmem_to_hbm [thread:$0]  %s837, 16, %s839, %s801
        $region60: #{tpu_custom_call.1} parent=43 // pred_fallthru
          _
        // Predicated region
        $region61: #{tpu_custom_call.1} parent=43 // pred_check
          %p842 = pneg %p256
        $region62: #{tpu_custom_call.1} parent=43 // pred_check_branch
          %844 = sbr.rel (%p842) target = $region64
        $region63: #{tpu_custom_call.1} parent=43 // pred_region
          %846 = vsyncadd %s805, 0
          %s847 = scalar_lea.hbm %s8, %s34
          %s849 = sshll.u32 %s807, 4
          %s850 = int_to_ptr.vmem [resolvable:$true] %s849
          %s851 = sshll.u32 %s847, 4
          %s852 = int_to_ptr.hbm [resolvable:$true] %s851
          %854 = dma.vmem_to_hbm [thread:$0]  %s850, 16, %s852, %s805
        $region64: #{tpu_custom_call.1} parent=43 // pred_fallthru
          _
        // Predicated region
        $region65: #{tpu_custom_call.1} parent=43 // pred_check
          %p855 = pneg %p282
        $region66: #{tpu_custom_call.1} parent=43 // pred_check_branch
          %857 = sbr.rel (%p855) target = $region68
        $region67: #{tpu_custom_call.1} parent=43 // pred_region
          %859 = vsyncadd %s809, 0
          %s860 = scalar_lea.hbm %s9, %s34
          %s862 = sshll.u32 %s811, 4
          %s863 = int_to_ptr.vmem [resolvable:$true] %s862
          %s864 = sshll.u32 %s860, 4
          %s865 = int_to_ptr.hbm [resolvable:$true] %s864
          %867 = dma.vmem_to_hbm [thread:$0]  %s863, 16, %s865, %s809
        $region68: #{tpu_custom_call.1} parent=43 // pred_fallthru
          _
      $region44: #{tpu_custom_call.1} parent=5 // pred_fallthru
        _
      %p868 = scmp.le.s32.totalorder 2, %s25
      // Predicated region
      $region69: #{tpu_custom_call.1} parent=5 // pred_check
        %p869 = pneg %p868
      $region70: #{tpu_custom_call.1} parent=5 // pred_check_branch
        %871 = sbr.rel (%p869) target = $region72
      $region71: #{tpu_custom_call.1} parent=5 // pred_region
        %s872 = ssub.s32 %s25, 2
        // Predicated region
        $region73: #{tpu_custom_call.1} parent=71 // pred_check
          %p873 = pneg %p210
        $region74: #{tpu_custom_call.1} parent=71 // pred_check_branch
          %875 = sbr.rel (%p873) target = $region76
        $region75: #{tpu_custom_call.1} parent=71 // pred_region
          %s876 = sand.u32 %s195, 1
          %s877 = scalar_lea.sflag [#allocation7], %s876
          %s878 = sand.u32 %s195, 1
          %s879 = smul.addr %s878, 128
          %s880 = scalar_lea.vmem [#allocation6], %s879
          %882 = dma.done %s877, 2048
        $region76: #{tpu_custom_call.1} parent=71 // pred_fallthru
          _
        // Predicated region
        $region77: #{tpu_custom_call.1} parent=71 // pred_check
          %p883 = pneg %p236
        $region78: #{tpu_custom_call.1} parent=71 // pred_check_branch
          %885 = sbr.rel (%p883) target = $region80
        $region79: #{tpu_custom_call.1} parent=71 // pred_region
          %s886 = sand.u32 %s31, 1
          %s887 = scalar_lea.sflag [#allocation9], %s886
          %s888 = sand.u32 %s221, 1
          %s889 = scalar_lea.vmem [#allocation8], %s888
          %891 = dma.done %s887, 16
        $region80: #{tpu_custom_call.1} parent=71 // pred_fallthru
          _
        // Predicated region
        $region81: #{tpu_custom_call.1} parent=71 // pred_check
          %p892 = pneg %p262
        $region82: #{tpu_custom_call.1} parent=71 // pred_check_branch
          %894 = sbr.rel (%p892) target = $region84
        $region83: #{tpu_custom_call.1} parent=71 // pred_region
          %s895 = sand.u32 %s31, 1
          %s896 = scalar_lea.sflag [#allocation9], %s895
          %s897 = sand.u32 %s247, 1
          %s898 = scalar_lea.vmem [#allocation10], %s897
          %900 = dma.done %s896, 16
        $region84: #{tpu_custom_call.1} parent=71 // pred_fallthru
          _
        // Predicated region
        $region85: #{tpu_custom_call.1} parent=71 // pred_check
          %p901 = pneg %p288
        $region86: #{tpu_custom_call.1} parent=71 // pred_check_branch
          %903 = sbr.rel (%p901) target = $region88
        $region87: #{tpu_custom_call.1} parent=71 // pred_region
          %s904 = sand.u32 %s273, 1
          %s905 = scalar_lea.sflag [#allocation12], %s904
          %s906 = sand.u32 %s273, 1
          %s907 = scalar_lea.vmem [#allocation11], %s906
          %909 = dma.done %s905, 16
        $region88: #{tpu_custom_call.1} parent=71 // pred_fallthru
          _
      $region72: #{tpu_custom_call.1} parent=5 // pred_fallthru
        _
    $region6: #{tpu_custom_call.1} parent=1 // loop_footer
      %s29 = sadd.s32 1, %s25
    $region7: #{tpu_custom_call.1} parent=1 // loop_footer_branch
      %24 = sbr.rel target = $region3
    $region8: #{tpu_custom_call.1} parent=1 // loop_exit
      _
    %910 = vsyncpa [#allocation7], 1
    %s911 = scalar_lea.sflag [#allocation7], 1
    %912 = vsyncpa %s911, 1
    %913 = vsyncpa [#allocation9], 1
    %s914 = scalar_lea.sflag [#allocation9], 1
    %915 = vsyncpa %s914, 1
    %916 = vsyncpa [#allocation12], 1
    %s917 = scalar_lea.sflag [#allocation12], 1
    %918 = vsyncpa %s917, 1

</llo_original>
